<compile_context>
chip_gen: v7x
topology: tpu7x:2x2x1
jax: 0.10.0
libtpu: 0.0.40
codegen_flags: <defaults>
</compile_context>

<pallas_src>
import functools

import jax
import jax.numpy as jnp
from jax import lax
from jax.experimental import pallas as pl
from jax.experimental.pallas import tpu as pltpu


def _round_up(x, m):
    return ((x + m - 1) // m) * m


def _vmem_budget_bytes():
    """Usable VMEM budget for this kernel, generation-aware with a safe fallback."""
    cap = 64 * 1024 * 1024  # conservative fallback (v7x per-TC physical VMEM)
    try:
        info = pltpu.get_tpu_info()
        cap = int(getattr(info, "vmem_capacity_bytes", cap))
    except Exception:
        pass
    # Leave ~20 MiB headroom for Mosaic internal scratch / semaphores.
    return max(24 * 1024 * 1024, min(cap - 20 * 1024 * 1024, 112 * 1024 * 1024))


def _choose_tiles(m_pad, vocab, k_pad, x_it, w_it, o_it, budget):
    """Pick (tm, tn, tk, full_k) under the VMEM budget.

    HBM traffic ~= (m/tm) * |W| + |x| + |out|  (the weight is re-streamed once per
    M tile; x stays resident across the inner vocab axis), so tm is maximized first,
    then tn (fewer grid steps, lane-dense stores).
    """
    tm_cands = [t for t in (1024, 768, 512, 384, 256, 192, 128, 96, 64, 48, 32, 16)
                if t <= m_pad] or [m_pad]
    if vocab >= 128:
        tn_top = min(1024, (vocab // 128) * 128)
        tn_cands = [t for t in (1024, 896, 768, 640, 512, 384, 256, 128) if t <= tn_top]
    else:
        tn_cands = [vocab]

    # Full-K first (no accumulator scratch, no K grid axis).
    for tm in tm_cands:
        for tn in tn_cands:
            need = (2 * tm * k_pad * x_it + 2 * tn * k_pad * w_it + 2 * tm * tn * o_it)
            if need <= budget:
                return tm, tn, k_pad, True

    # K-tiled fallback (very large hidden / f32 inputs that don't fit full-K).
    tk_cands = [t for t in (4096, 2048, 1024, 512, 256, 128)
                if t <= k_pad and k_pad % t == 0]
    for tm in tm_cands:
        for tn in tn_cands:
            for tk in tk_cands:
                need = (2 * tm * tk * x_it + 2 * tn * tk * w_it
                        + 2 * tm * tn * o_it + tm * tn * 4)
                if need <= budget:
                    return tm, tn, tk, False
    return tm_cands[-1], tn_cands[-1], 128, False


def _fullk_kernel(x_ref, w_ref, o_ref, *, pre_scale):
    """Full-K path: one MXU pass per (M-tile, vocab-tile), no accumulator scratch.

    x_ref : (tm, K)   activation slab (native dtype)
    w_ref : (tn, K)   vocab x hidden slab of the tied embedding weight
    o_ref : (tm, tn)  output logits tile
    """
    acc = lax.dot_general(
        x_ref[...], w_ref[...],
        dimension_numbers=(((1,), (1,)), ((), ())),   # contract hidden vs hidden (NT)
        preferred_element_type=jnp.float32,
    )
    if pre_scale != 1.0:
        acc = acc * pre_scale
    o_ref[...] = acc.astype(o_ref.dtype)


def _ktiled_kernel(x_ref, w_ref, o_ref, acc_ref, *, pre_scale):
    """K-tiled path (very large hidden): f32 accumulator resident across the K axis."""
    k = pl.program_id(2)

    @pl.when(k == 0)
    def _():
        acc_ref[...] = jnp.zeros_like(acc_ref)

    acc_ref[...] += lax.dot_general(
        x_ref[...], w_ref[...],
        dimension_numbers=(((1,), (1,)), ((), ())),
        preferred_element_type=jnp.float32,
    )

    @pl.when(k == pl.num_programs(2) - 1)
    def _():
        acc = acc_ref[...]
        if pre_scale != 1.0:
            acc = acc * pre_scale
        o_ref[...] = acc.astype(o_ref.dtype)


def weight_tied_vocab_projection(x, weight, pre_scale=1.0):
    """x: (..., hidden); weight: (vocab, hidden) -> logits (..., vocab).

    `pre_scale` must be a static Python scalar (it is a constructor constant in the
    PyTorch module); it is baked into the kernel and skipped entirely when == 1.0.
    """
    *lead, hidden = x.shape
    vocab, hidden_w = weight.shape
    assert hidden == hidden_w, "hidden size mismatch between x and weight"
    out_dtype = x.dtype

    m = 1
    for d in lead:
        m *= d
    x2d = x.reshape(m, hidden)

    k_pad = _round_up(hidden, 128)
    m_pad = _round_up(max(m, 1), 16)

    # Pad only the cheap activation (M to a 16-multiple, hidden to a 128-multiple).
    if (m_pad, k_pad) != (m, hidden):
        x2d = jnp.pad(x2d, ((0, m_pad - m), (0, k_pad - hidden)))
    # The big vocab axis of the tied weight is never padded or copied; ragged last
    # vocab tiles are handled by masked edge stores.  Only the rare hidden%128 != 0
    # case needs zero K-padding of the weight for a correct contraction.
    w2d = weight
    if k_pad != hidden:
        w2d = jnp.pad(w2d, ((0, 0), (0, k_pad - hidden)))

    x_it = x2d.dtype.itemsize
    w_it = w2d.dtype.itemsize
    o_it = jnp.dtype(out_dtype).itemsize

    budget = _vmem_budget_bytes()
    tm, tn, tk, full_k = _choose_tiles(m_pad, vocab, k_pad, x_it, w_it, o_it, budget)

    n_m = pl.cdiv(m_pad, tm)
    n_n = pl.cdiv(vocab, tn)
    scale = float(pre_scale)

    if full_k:
        cost = pl.CostEstimate(
            flops=2 * m * vocab * hidden,
            transcendentals=0,
            # Weight re-streamed once per M tile; x resident across the vocab axis.
            bytes_accessed=(x2d.size * x_it
                            + n_m * w2d.size * w_it
                            + m_pad * vocab * o_it),
        )
        out2d = pl.pallas_call(
            functools.partial(_fullk_kernel, pre_scale=scale),
            out_shape=jax.ShapeDtypeStruct((m_pad, vocab), out_dtype),
            grid_spec=pltpu.PrefetchScalarGridSpec(
                num_scalar_prefetch=0,
                grid=(n_m, n_n),
                in_specs=[
                    pl.BlockSpec((tm, k_pad), lambda i, j: (i, 0)),
                    pl.BlockSpec((tn, k_pad), lambda i, j: (j, 0)),
                ],
                out_specs=pl.BlockSpec((tm, tn), lambda i, j: (i, j)),
            ),
            compiler_params=pltpu.CompilerParams(
                dimension_semantics=("parallel", "parallel"),
                vmem_limit_bytes=budget,
            ),
            cost_estimate=cost,
        )(x2d, w2d)
    else:
        n_k = pl.cdiv(k_pad, tk)
        cost = pl.CostEstimate(
            flops=2 * m * vocab * hidden,
            transcendentals=0,
            bytes_accessed=(n_n * x2d.size * x_it
                            + n_m * w2d.size * w_it
                            + m_pad * vocab * o_it),
        )
        out2d = pl.pallas_call(
            functools.partial(_ktiled_kernel, pre_scale=scale),
            out_shape=jax.ShapeDtypeStruct((m_pad, vocab), out_dtype),
            grid_spec=pltpu.PrefetchScalarGridSpec(
                num_scalar_prefetch=0,
                grid=(n_m, n_n, n_k),
                in_specs=[
                    pl.BlockSpec((tm, tk), lambda i, j, k: (i, k)),
                    pl.BlockSpec((tn, tk), lambda i, j, k: (j, k)),
                ],
                out_specs=pl.BlockSpec((tm, tn), lambda i, j, k: (i, j)),
                scratch_shapes=[pltpu.VMEM((tm, tn), jnp.float32)],
            ),
            compiler_params=pltpu.CompilerParams(
                dimension_semantics=("parallel", "parallel", "arbitrary"),
                vmem_limit_bytes=budget,
            ),
            cost_estimate=cost,
        )(x2d, w2d)

    if m_pad != m:
        out2d = out2d[:m]   # rare (m not a multiple of 16): row-only trim, <=15 rows
    return out2d.reshape(*lead, vocab)


if __name__ == "__main__":
    key = jax.random.PRNGKey(0)
    kx, kw, kx2, kw2 = jax.random.split(key, 4)

    # Case 1: ragged hidden/vocab (exercises the K-pad + masked vocab-edge paths).
    batch, seq, hidden, vocab = 2, 8, 160, 1000
    pre_scale = 0.5
    x = jax.random.normal(kx, (batch, seq, hidden), dtype=jnp.float32)
    embedding_weight = jax.random.normal(kw, (vocab, hidden), dtype=jnp.float32) * 0.02

    logits = weight_tied_vocab_projection(x, embedding_weight, pre_scale=pre_scale)
    logits = jax.block_until_ready(logits)
    ref = jnp.einsum("bsh,vh->bsv", x * pre_scale, embedding_weight)
    assert logits.shape == (batch, seq, vocab)
    assert jnp.allclose(logits, ref, atol=1e-4, rtol=1e-4)

    # Case 2: 128-aligned weight (no weight padding at all), ragged token count,
    # pre_scale == 1.0 fast epilogue.
    b2, s2, h2, v2 = 3, 5, 256, 384
    x2 = jax.random.normal(kx2, (b2, s2, h2), dtype=jnp.float32)
    w2 = jax.random.normal(kw2, (v2, h2), dtype=jnp.float32) * 0.02
    logits2 = jax.block_until_ready(weight_tied_vocab_projection(x2, w2))
    ref2 = jnp.einsum("bsh,vh->bsv", x2, w2)
    assert logits2.shape == (b2, s2, v2)
    assert jnp.allclose(logits2, ref2, atol=1e-4, rtol=1e-4)

    print("KERNEL_OK")
</pallas_src>

<mosaic_0001>
module attributes {stable_mosaic.version = 11 : i64} {
  func.func @_fullk_kernel(%arg0: i32, %arg1: i32, %arg2: memref<16x256xf32, #tpu.memory_space<vmem>>, %arg3: memref<896x256xf32, #tpu.memory_space<vmem>>, %arg4: memref<16x896xf32, #tpu.memory_space<vmem>>) attributes {dimension_semantics = [#tpu.dimension_semantics<parallel>, #tpu.dimension_semantics<parallel>], iteration_bounds = array<i64: 1, 2>, scalar_prefetch = 0 : i64, scratch_operands = 0 : i64, tpu.core_type = #tpu.core_type<tc>, window_params = [{transform_indices = @transform_0, window_bounds = array<i64: 16, 256>}, {transform_indices = @transform_1, window_bounds = array<i64: 896, 256>}, {transform_indices = @transform_2, window_bounds = array<i64: 16, 896>}]} {
    %c0 = arith.constant 0 : index
    %c0_0 = arith.constant 0 : index
    %0 = vector.load %arg2[%c0, %c0_0] : memref<16x256xf32, #tpu.memory_space<vmem>>, vector<16x256xf32>
    %c0_1 = arith.constant 0 : index
    %c0_2 = arith.constant 0 : index
    %1 = vector.load %arg3[%c0_1, %c0_2] : memref<896x256xf32, #tpu.memory_space<vmem>>, vector<896x256xf32>
    %cst = arith.constant dense<0.000000e+00> : vector<16x896xf32>
    %2 = tpu.matmul %0, %1, %cst {dimension_numbers = #tpu.dot_dimension_numbers<[1], [1], [0], [0], [0, 0, 1, 0], [], []>} : vector<16x256xf32>, vector<896x256xf32>, vector<16x896xf32> -> vector<16x896xf32>
    %cst_3 = arith.constant 5.000000e-01 : f32
    %3 = vector.broadcast %cst_3 : f32 to vector<16x896xf32>
    %4 = arith.mulf %2, %3 : vector<16x896xf32>
    %c0_4 = arith.constant 0 : index
    %c0_5 = arith.constant 0 : index
    %5 = vector.load %arg4[%c0_4, %c0_5] : memref<16x896xf32, #tpu.memory_space<vmem>>, vector<16x896xf32>
    tpu.vector_store %arg4[%c0_4, %c0_5], %4 {strides = array<i32>} : memref<16x896xf32, #tpu.memory_space<vmem>>, vector<16x896xf32>,
    return
  }
  func.func @transform_0(%arg0: i32, %arg1: i32) -> (i32, i32) {
    %c0_i32 = arith.constant 0 : i32
    %c0_i32_0 = arith.constant 0 : i32
    return %arg0, %c0_i32 : i32, i32
  }
  func.func @transform_1(%arg0: i32, %arg1: i32) -> (i32, i32) {
    %c0_i32 = arith.constant 0 : i32
    %c0_i32_0 = arith.constant 0 : i32
    return %arg1, %c0_i32 : i32, i32
  }
  func.func @transform_2(%arg0: i32, %arg1: i32) -> (i32, i32) {
    %c0_i32 = arith.constant 0 : i32
    return %arg0, %arg1 : i32, i32
  }
}

</mosaic_0001>

<llo_original>
// kernel: tpu_custom_call.1
$region0: #{tpu_custom_call.1}
  #allocation0 [shape = 'u32[]', space=smem, size = 0x4, offset = 0x4, fixed_abs, tag = 'smem constant byte address 0x4 - core index']
  #allocation1 [shape = 'u32[144,128]{1,0:T(1,128)}', space=vmem, size = 0x12000, scoped, tag = 'internal scratch']
  %s0 = inlined_call_operand.hbm [shape: f32[16,256], index: 0, kind: input, shape index: {}]
  %s1 = inlined_call_operand.hbm [shape: f32[1000,256], index: 1, kind: input, shape index: {}]
  %s2 = inlined_call_operand.hbm [shape: f32[16,1000], index: 2, kind: output, shape index: {}]
  %s3 = sld [smem:[#allocation0]]
  $region49: #{tpu_custom_call.1} parent=0
    _
  %s5 = ssub.s32 1, %s3
  %s6 = scalar_select 0, %s5, %s3
  $region1: #{tpu_custom_call.1} parent=0
    #allocation2 [shape = 'u8[16384]{0}', space=vmem, size = 0x4000, scoped, tag = 'input window, operand 0, single buffered']
    #allocation3 [shape = 's32[2]{0}', space=sflag, size = 0x8, scoped, tag = 'scoped memory for tpu_custom_call.1']
    #allocation4 [shape = 's32[2]{0}', space=sflag, size = 0x8, scoped, tag = 'scoped memory for tpu_custom_call.1']
    #allocation5 [shape = 'u8[1835008]{0}', space=vmem, size = 0x1c0000, scoped, tag = 'input window, operand 1']
    #allocation6 [shape = 's32[2]{0}', space=sflag, size = 0x8, scoped, tag = 'scoped memory for tpu_custom_call.1']
    #allocation7 [shape = 'u8[114688]{0}', space=vmem, size = 0x1c000, scoped, tag = 'output window, operand 0']
    %7 = vsyncpa [#allocation3], 0
    %8 = vsyncpa [#allocation6], 0
    %s9 = scalar_lea.sflag [#allocation6], 1
    %10 = vsyncpa %s9, 0
    %11 = vsyncpa [#allocation4], 0
    %s12 = scalar_lea.sflag [#allocation4], 1
    %13 = vsyncpa %s12, 0
    loop: start=0, step=1, limit=4
    $region2: #{tpu_custom_call.1} parent=1 // loop_pre_header
      _
    $region3: #{tpu_custom_call.1} parent=1 // loop_header
      %s15 = sphi 0, %s19
      %p16 = scmp.ge.s32.totalorder %s15, 4
      %s22 = sphi 0, %s34
      %s23 = sphi 0, %s30
      %s24 = sphi 0, %s22
      %s25 = sphi 0, %s23
      %s26 = sphi 0, %s24
      %s27 = sphi 0, %s25
      %s37 = sphi 0, %s39
      %s40 = sphi 0, %s37
      %s41 = sphi 0, %s40
      %s57 = sphi 0, %s41
      %s63 = sphi 0, %s65
      %s66 = sphi 0, %s63
      %s67 = sphi 0, %s66
      %s83 = sphi 0, %s67
      %s91 = sphi 0, %s93
      %s94 = sphi 0, %s91
      %s95 = sphi 0, %s94
      %s111 = sphi 0, %s95
    $region4: #{tpu_custom_call.1} parent=1 // loop_header_branch
      %18 = sbr.rel (%p16) target = $region8
    $region5: #{tpu_custom_call.1} parent=1 // loop_body
      %s20 = ssub.s32 %s15, 1
      %s21 = ssub.s32 %s15, 2
      %s28 = sadd.s32 1, %s23
      %p29 = scmp.ge.s32.totalorder %s28, 2
      %s30 = scalar_select %p29, 0, %s28
      %s31 = sadd.s32 1, %s22
      %s32 = scalar_select %p29, %s31, %s22
      %p33 = scmp.ge.s32.totalorder %s32, 1
      %s34 = scalar_select %p33, 0, %s32
      %s35 = ssub.s32 %s22, %s34
      %p36 = scmp.eq.s32.totalorder %s35, 0
      %s38 = sadd.s32 %s37, 1
      %s39 = scalar_select %p36, %s37, %s38
      %p42 = pneg %p36
      %p43 = scmp.eq.s32.totalorder %s15, 1
      %p44 = por %p42, %p43
      %p45 = scmp.ne.s32.totalorder %s37, %s40
      %p46 = scmp.eq.s32.totalorder %s15, 0
      %p47 = por %p45, %p46
      %p48 = scmp.ne.s32.totalorder %s37, %s40
      %p49 = scmp.eq.s32.totalorder %s20, 1
      %p50 = por %p48, %p49
      %p51 = scmp.ne.s32.totalorder %s40, %s41
      %p52 = scmp.eq.s32.totalorder %s20, 0
      %p53 = por %p51, %p52
      %p54 = scmp.ne.s32.totalorder %s40, %s41
      %p55 = scmp.eq.s32.totalorder %s21, 1
      %p56 = por %p54, %p55
      %p58 = scmp.ne.s32.totalorder %s41, %s57
      %p59 = scmp.eq.s32.totalorder %s21, 0
      %p60 = por %p58, %p59
      %s61 = ssub.s32 %s23, %s30
      %p62 = scmp.eq.s32.totalorder %s61, 0
      %s64 = sadd.s32 %s63, 1
      %s65 = scalar_select %p62, %s63, %s64
      %p68 = pneg %p62
      %p69 = scmp.eq.s32.totalorder %s15, 1
      %p70 = por %p68, %p69
      %p71 = scmp.ne.s32.totalorder %s63, %s66
      %p72 = scmp.eq.s32.totalorder %s15, 0
      %p73 = por %p71, %p72
      %p74 = scmp.ne.s32.totalorder %s63, %s66
      %p75 = scmp.eq.s32.totalorder %s20, 1
      %p76 = por %p74, %p75
      %p77 = scmp.ne.s32.totalorder %s66, %s67
      %p78 = scmp.eq.s32.totalorder %s20, 0
      %p79 = por %p77, %p78
      %p80 = scmp.ne.s32.totalorder %s66, %s67
      %p81 = scmp.eq.s32.totalorder %s21, 1
      %p82 = por %p80, %p81
      %p84 = scmp.ne.s32.totalorder %s67, %s83
      %p85 = scmp.eq.s32.totalorder %s21, 0
      %p86 = por %p84, %p85
      %s87 = ssub.s32 %s22, %s34
      %s88 = ssub.s32 %s23, %s30
      %s89 = sor.u32 %s87, %s88
      %p90 = scmp.eq.s32.totalorder %s89, 0
      %s92 = sadd.s32 %s91, 1
      %s93 = scalar_select %p90, %s91, %s92
      %p96 = pneg %p90
      %p97 = scmp.eq.s32.totalorder %s15, 1
      %p98 = por %p96, %p97
      %p99 = scmp.ne.s32.totalorder %s91, %s94
      %p100 = scmp.eq.s32.totalorder %s15, 0
      %p101 = por %p99, %p100
      %p102 = scmp.ne.s32.totalorder %s91, %s94
      %p103 = scmp.eq.s32.totalorder %s20, 1
      %p104 = por %p102, %p103
      %p105 = scmp.ne.s32.totalorder %s94, %s95
      %p106 = scmp.eq.s32.totalorder %s20, 0
      %p107 = por %p105, %p106
      %p108 = scmp.ne.s32.totalorder %s94, %s95
      %p109 = scmp.eq.s32.totalorder %s21, 1
      %p110 = por %p108, %p109
      %p112 = scmp.ne.s32.totalorder %s95, %s111
      %p113 = scmp.eq.s32.totalorder %s21, 0
      %p114 = por %p112, %p113
      %p115 = scmp.le.s32.totalorder 1, %s15
      %p116 = scmp.lt.s32.totalorder %s15, 3
      %p117 = pnand %p115, %p116
      %p118 = pneg %p117
      // Predicated region
      $region9: #{tpu_custom_call.1} parent=5 // pred_check
        _
      $region10: #{tpu_custom_call.1} parent=5 // pred_check_branch
        %120 = sbr.rel (%p117) target = $region12
      $region11: #{tpu_custom_call.1} parent=5 // pred_region
        %s121 = ssub.s32 %s15, 1
        // Predicated region
        $region13: #{tpu_custom_call.1} parent=11 // pred_check
          %p122 = pneg %p53
        $region14: #{tpu_custom_call.1} parent=11 // pred_check_branch
          %124 = sbr.rel (%p122) target = $region16
        $region15: #{tpu_custom_call.1} parent=11 // pred_region
          %s125 = smul.u32 2, %s24
          %s127 = ssub.s32 512, 512
          %128 = vsyncadd [#allocation3], %s127
          %s129 = smul.addr %s125, 2
          %s130 = smul.addr %s129, 128
          %s131 = scalar_lea.hbm %s0, %s130
          %s132 = sshll.u32 [#allocation2], 4
          %s133 = int_to_ptr.vmem [resolvable:$true] %s132
          %138 = dma.hbm_to_vmem [thread:$0]  %s131, 512, %s133, [#allocation3], 256, 256, 16
        $region16: #{tpu_custom_call.1} parent=11 // pred_fallthru
          _
      $region12: #{tpu_custom_call.1} parent=5 // pred_fallthru
        _
      %p139 = scmp.lt.s32.totalorder %s15, 2
      // Predicated region
      $region17: #{tpu_custom_call.1} parent=5 // pred_check
        %p140 = pneg %p139
      $region18: #{tpu_custom_call.1} parent=5 // pred_check_branch
        %142 = sbr.rel (%p140) target = $region20
      $region19: #{tpu_custom_call.1} parent=5 // pred_region
        // Predicated region
        $region21: #{tpu_custom_call.1} parent=19 // pred_check
          %p143 = pneg %p73
        $region22: #{tpu_custom_call.1} parent=19 // pred_check_branch
          %145 = sbr.rel (%p143) target = $region24
        $region23: #{tpu_custom_call.1} parent=19 // pred_region
          %s146 = sand.u32 %s63, 1
          %s147 = scalar_lea.sflag [#allocation6], %s146
          %s148 = sand.u32 %s63, 1
          %s149 = smul.addr %s148, 1792
          %s150 = scalar_lea.vmem [#allocation5], %s149
          %s151 = smul.u32 112, %s23
          %s152 = ssub.s32 125, %s151
          %p153 = scmp.lt.s32.totalorder %s152, 112
          %s154 = scalar_select %p153, %s152, 112
          %s155 = smul.u32 128, %s154
          %s156 = smul.u32 %s155, 2
          %s158 = ssub.s32 28672, %s156
          %159 = vsyncadd %s147, %s158
          %p160 = scmp.ne.s32.totalorder 0, %s156
          %s161 = smul.addr %s151, 2
          %s162 = smul.addr %s161, 128
          %s163 = scalar_lea.hbm %s1, %s162
          %s164 = smul.u32 16, %s154
          %s165 = sshll.u32 %s150, 4
          %s166 = int_to_ptr.vmem [resolvable:$true] %s165
          %s167 = sshll.u32 %s164, 4
          %171 = dma.hbm_to_vmem [thread:$0]  (%p160), %s163, %s167, %s166, %s147, 256, 256, 16
        $region24: #{tpu_custom_call.1} parent=19 // pred_fallthru
          _
      $region20: #{tpu_custom_call.1} parent=5 // pred_fallthru
        _
      %p172 = scmp.le.s32.totalorder 1, %s15
      %p173 = scmp.lt.s32.totalorder %s15, 3
      %p174 = pnand %p172, %p173
      %p175 = pneg %p174
      // Predicated region
      $region25: #{tpu_custom_call.1} parent=5 // pred_check
        _
      $region26: #{tpu_custom_call.1} parent=5 // pred_check_branch
        %177 = sbr.rel (%p174) target = $region28
      $region27: #{tpu_custom_call.1} parent=5 // pred_region
        %s178 = ssub.s32 %s15, 1
        // Predicated region
        $region29: #{tpu_custom_call.1} parent=27 // pred_check
          %p179 = pneg %p53
        $region30: #{tpu_custom_call.1} parent=27 // pred_check_branch
          %181 = sbr.rel (%p179) target = $region32
        $region31: #{tpu_custom_call.1} parent=27 // pred_region
          %182 = dma.done [#allocation3], 512
        $region32: #{tpu_custom_call.1} parent=27 // pred_fallthru
          _
        %s183 = sand.u32 %s66, 1
        %s184 = scalar_lea.sflag [#allocation6], %s183
        %s185 = sand.u32 %s66, 1
        %s186 = smul.addr %s185, 1792
        %s187 = scalar_lea.vmem [#allocation5], %s186
        // Predicated region
        $region33: #{tpu_custom_call.1} parent=27 // pred_check
          %p188 = pneg %p79
        $region34: #{tpu_custom_call.1} parent=27 // pred_check_branch
          %190 = sbr.rel (%p188) target = $region36
        $region35: #{tpu_custom_call.1} parent=27 // pred_region
          %191 = dma.done %s184, 28672
        $region36: #{tpu_custom_call.1} parent=27 // pred_fallthru
          _
        %p192 = pneg %p53
        %p193 = pneg %p50
        %s194 = sand.u32 %s66, 1
        %s195 = scalar_lea.sflag [#allocation6], %s194
        %s196 = sand.u32 %s66, 1
        %s197 = smul.addr %s196, 1792
        %s198 = scalar_lea.vmem [#allocation5], %s197
        %p199 = pneg %p79
        %p200 = pneg %p76
        %p201 = pneg %p107
        %p202 = pneg %p104
        %s203 = sand.u32 %s94, 1
        %s204 = scalar_lea.sflag [#allocation4], %s203
        %s205 = sand.u32 %s94, 1
        %s206 = smul.addr %s205, 112
        %s207 = scalar_lea.vmem [#allocation7], %s206
        %s208 = smul.u32 2, %s24
        %s209 = smul.u32 112, %s25
        %s210 = ssub.s32 125, %s209
        %p211 = scmp.lt.s32.totalorder %s210, 112
        %s212 = scalar_select %p211, %s210, 112
        %s213 = smul.u32 128, %s212
        %s214 = smul.u32 %s213, 2
        %s215 = smul.u32 2, %s24
        %s216 = smul.u32 7, %s25
        %s217 = ssub.s32 8, %s216
        %p218 = scmp.lt.s32.totalorder %s217, 7
        %s219 = scalar_select %p218, %s217, 7
        %s220 = smul.u32 256, %s219
        %v221 = vld [vmem:[#allocation2] sm:$0xff]
        %v222 = vld [vmem:[#allocation2 + $0x8] sm:$0xff]
        %v223 = vld [vmem:[#allocation2 + $0x10] sm:$0xff]
        %v224 = vld [vmem:[#allocation2 + $0x18] sm:$0xff]
        %v225 = vld [vmem:[%s187] sm:$0xff]
        %v226 = vld [vmem:[%s187 + $0x8] sm:$0xff]
        %v227 = vld [vmem:[%s187 + $0x10] sm:$0xff]
        %v228 = vld [vmem:[%s187 + $0x18] sm:$0xff]
        %v229 = vld [vmem:[%s187 + $0x20] sm:$0xff]
        %v230 = vld [vmem:[%s187 + $0x28] sm:$0xff]
        %v231 = vld [vmem:[%s187 + $0x30] sm:$0xff]
        %v232 = vld [vmem:[%s187 + $0x38] sm:$0xff]
        %v233 = vld [vmem:[%s187 + $0x40] sm:$0xff]
        %v234 = vld [vmem:[%s187 + $0x48] sm:$0xff]
        %v235 = vld [vmem:[%s187 + $0x50] sm:$0xff]
        %v236 = vld [vmem:[%s187 + $0x58] sm:$0xff]
        %v237 = vld [vmem:[%s187 + $0x60] sm:$0xff]
        %v238 = vld [vmem:[%s187 + $0x68] sm:$0xff]
        %v239 = vld [vmem:[%s187 + $0x70] sm:$0xff]
        %v240 = vld [vmem:[%s187 + $0x78] sm:$0xff]
        %v241 = vld [vmem:[%s187 + $0x80] sm:$0xff]
        %v242 = vld [vmem:[%s187 + $0x88] sm:$0xff]
        %v243 = vld [vmem:[%s187 + $0x90] sm:$0xff]
        %v244 = vld [vmem:[%s187 + $0x98] sm:$0xff]
        %v245 = vld [vmem:[%s187 + $0xa0] sm:$0xff]
        %v246 = vld [vmem:[%s187 + $0xa8] sm:$0xff]
        %v247 = vld [vmem:[%s187 + $0xb0] sm:$0xff]
        %v248 = vld [vmem:[%s187 + $0xb8] sm:$0xff]
        %v249 = vld [vmem:[%s187 + $0xc0] sm:$0xff]
        %v250 = vld [vmem:[%s187 + $0xc8] sm:$0xff]
        %v251 = vld [vmem:[%s187 + $0xd0] sm:$0xff]
        %v252 = vld [vmem:[%s187 + $0xd8] sm:$0xff]
        %v253 = vld [vmem:[%s187 + $0xe0] sm:$0xff]
        %v254 = vld [vmem:[%s187 + $0xe8] sm:$0xff]
        %v255 = vld [vmem:[%s187 + $0xf0] sm:$0xff]
        %v256 = vld [vmem:[%s187 + $0xf8] sm:$0xff]
        %v257 = vld [vmem:[%s187 + $0x100] sm:$0xff]
        %v258 = vld [vmem:[%s187 + $0x108] sm:$0xff]
        %v259 = vld [vmem:[%s187 + $0x110] sm:$0xff]
        %v260 = vld [vmem:[%s187 + $0x118] sm:$0xff]
        %v261 = vld [vmem:[%s187 + $0x120] sm:$0xff]
        %v262 = vld [vmem:[%s187 + $0x128] sm:$0xff]
        %v263 = vld [vmem:[%s187 + $0x130] sm:$0xff]
        %v264 = vld [vmem:[%s187 + $0x138] sm:$0xff]
        %v265 = vld [vmem:[%s187 + $0x140] sm:$0xff]
        %v266 = vld [vmem:[%s187 + $0x148] sm:$0xff]
        %v267 = vld [vmem:[%s187 + $0x150] sm:$0xff]
        %v268 = vld [vmem:[%s187 + $0x158] sm:$0xff]
        %v269 = vld [vmem:[%s187 + $0x160] sm:$0xff]
        %v270 = vld [vmem:[%s187 + $0x168] sm:$0xff]
        %v271 = vld [vmem:[%s187 + $0x170] sm:$0xff]
        %v272 = vld [vmem:[%s187 + $0x178] sm:$0xff]
        %v273 = vld [vmem:[%s187 + $0x180] sm:$0xff]
        %v274 = vld [vmem:[%s187 + $0x188] sm:$0xff]
        %v275 = vld [vmem:[%s187 + $0x190] sm:$0xff]
        %v276 = vld [vmem:[%s187 + $0x198] sm:$0xff]
        %v277 = vld [vmem:[%s187 + $0x1a0] sm:$0xff]
        %v278 = vld [vmem:[%s187 + $0x1a8] sm:$0xff]
        %v279 = vld [vmem:[%s187 + $0x1b0] sm:$0xff]
        %v280 = vld [vmem:[%s187 + $0x1b8] sm:$0xff]
        %v281 = vld [vmem:[%s187 + $0x1c0] sm:$0xff]
        %v282 = vld [vmem:[%s187 + $0x1c8] sm:$0xff]
        %v283 = vld [vmem:[%s187 + $0x1d0] sm:$0xff]
        %v284 = vld [vmem:[%s187 + $0x1d8] sm:$0xff]
        %v285 = vld [vmem:[%s187 + $0x1e0] sm:$0xff]
        %v286 = vld [vmem:[%s187 + $0x1e8] sm:$0xff]
        %v287 = vld [vmem:[%s187 + $0x1f0] sm:$0xff]
        %v288 = vld [vmem:[%s187 + $0x1f8] sm:$0xff]
        %v289 = vld [vmem:[%s187 + $0x200] sm:$0xff]
        %v290 = vld [vmem:[%s187 + $0x208] sm:$0xff]
        %v291 = vld [vmem:[%s187 + $0x210] sm:$0xff]
        %v292 = vld [vmem:[%s187 + $0x218] sm:$0xff]
        %v293 = vld [vmem:[%s187 + $0x220] sm:$0xff]
        %v294 = vld [vmem:[%s187 + $0x228] sm:$0xff]
        %v295 = vld [vmem:[%s187 + $0x230] sm:$0xff]
        %v296 = vld [vmem:[%s187 + $0x238] sm:$0xff]
        %v297 = vld [vmem:[%s187 + $0x240] sm:$0xff]
        %v298 = vld [vmem:[%s187 + $0x248] sm:$0xff]
        %v299 = vld [vmem:[%s187 + $0x250] sm:$0xff]
        %v300 = vld [vmem:[%s187 + $0x258] sm:$0xff]
        %v301 = vld [vmem:[%s187 + $0x260] sm:$0xff]
        %v302 = vld [vmem:[%s187 + $0x268] sm:$0xff]
        %v303 = vld [vmem:[%s187 + $0x270] sm:$0xff]
        %v304 = vld [vmem:[%s187 + $0x278] sm:$0xff]
        %v305 = vld [vmem:[%s187 + $0x280] sm:$0xff]
        %v306 = vld [vmem:[%s187 + $0x288] sm:$0xff]
        %v307 = vld [vmem:[%s187 + $0x290] sm:$0xff]
        %v308 = vld [vmem:[%s187 + $0x298] sm:$0xff]
        %v309 = vld [vmem:[%s187 + $0x2a0] sm:$0xff]
        %v310 = vld [vmem:[%s187 + $0x2a8] sm:$0xff]
        %v311 = vld [vmem:[%s187 + $0x2b0] sm:$0xff]
        %v312 = vld [vmem:[%s187 + $0x2b8] sm:$0xff]
        %v313 = vld [vmem:[%s187 + $0x2c0] sm:$0xff]
        %v314 = vld [vmem:[%s187 + $0x2c8] sm:$0xff]
        %v315 = vld [vmem:[%s187 + $0x2d0] sm:$0xff]
        %v316 = vld [vmem:[%s187 + $0x2d8] sm:$0xff]
        %v317 = vld [vmem:[%s187 + $0x2e0] sm:$0xff]
        %v318 = vld [vmem:[%s187 + $0x2e8] sm:$0xff]
        %v319 = vld [vmem:[%s187 + $0x2f0] sm:$0xff]
        %v320 = vld [vmem:[%s187 + $0x2f8] sm:$0xff]
        %v321 = vld [vmem:[%s187 + $0x300] sm:$0xff]
        %v322 = vld [vmem:[%s187 + $0x308] sm:$0xff]
        %v323 = vld [vmem:[%s187 + $0x310] sm:$0xff]
        %v324 = vld [vmem:[%s187 + $0x318] sm:$0xff]
        %v325 = vld [vmem:[%s187 + $0x320] sm:$0xff]
        %v326 = vld [vmem:[%s187 + $0x328] sm:$0xff]
        %v327 = vld [vmem:[%s187 + $0x330] sm:$0xff]
        %v328 = vld [vmem:[%s187 + $0x338] sm:$0xff]
        %v329 = vld [vmem:[%s187 + $0x340] sm:$0xff]
        %v330 = vld [vmem:[%s187 + $0x348] sm:$0xff]
        %v331 = vld [vmem:[%s187 + $0x350] sm:$0xff]
        %v332 = vld [vmem:[%s187 + $0x358] sm:$0xff]
        %v333 = vld [vmem:[%s187 + $0x360] sm:$0xff]
        %v334 = vld [vmem:[%s187 + $0x368] sm:$0xff]
        %v335 = vld [vmem:[%s187 + $0x370] sm:$0xff]
        %v336 = vld [vmem:[%s187 + $0x378] sm:$0xff]
        %v337 = vld [vmem:[%s187 + $0x380] sm:$0xff]
        %v338 = vld [vmem:[%s187 + $0x388] sm:$0xff]
        %v339 = vld [vmem:[%s187 + $0x390] sm:$0xff]
        %v340 = vld [vmem:[%s187 + $0x398] sm:$0xff]
        %v341 = vld [vmem:[%s187 + $0x3a0] sm:$0xff]
        %v342 = vld [vmem:[%s187 + $0x3a8] sm:$0xff]
        %v343 = vld [vmem:[%s187 + $0x3b0] sm:$0xff]
        %v344 = vld [vmem:[%s187 + $0x3b8] sm:$0xff]
        %v345 = vld [vmem:[%s187 + $0x3c0] sm:$0xff]
        %v346 = vld [vmem:[%s187 + $0x3c8] sm:$0xff]
        %v347 = vld [vmem:[%s187 + $0x3d0] sm:$0xff]
        %v348 = vld [vmem:[%s187 + $0x3d8] sm:$0xff]
        %v349 = vld [vmem:[%s187 + $0x3e0] sm:$0xff]
        %v350 = vld [vmem:[%s187 + $0x3e8] sm:$0xff]
        %v351 = vld [vmem:[%s187 + $0x3f0] sm:$0xff]
        %v352 = vld [vmem:[%s187 + $0x3f8] sm:$0xff]
        %v353 = vld [vmem:[%s187 + $0x400] sm:$0xff]
        %v354 = vld [vmem:[%s187 + $0x408] sm:$0xff]
        %v355 = vld [vmem:[%s187 + $0x410] sm:$0xff]
        %v356 = vld [vmem:[%s187 + $0x418] sm:$0xff]
        %v357 = vld [vmem:[%s187 + $0x420] sm:$0xff]
        %v358 = vld [vmem:[%s187 + $0x428] sm:$0xff]
        %v359 = vld [vmem:[%s187 + $0x430] sm:$0xff]
        %v360 = vld [vmem:[%s187 + $0x438] sm:$0xff]
        %v361 = vld [vmem:[%s187 + $0x440] sm:$0xff]
        %v362 = vld [vmem:[%s187 + $0x448] sm:$0xff]
        %v363 = vld [vmem:[%s187 + $0x450] sm:$0xff]
        %v364 = vld [vmem:[%s187 + $0x458] sm:$0xff]
        %v365 = vld [vmem:[%s187 + $0x460] sm:$0xff]
        %v366 = vld [vmem:[%s187 + $0x468] sm:$0xff]
        %v367 = vld [vmem:[%s187 + $0x470] sm:$0xff]
        %v368 = vld [vmem:[%s187 + $0x478] sm:$0xff]
        %v369 = vld [vmem:[%s187 + $0x480] sm:$0xff]
        %v370 = vld [vmem:[%s187 + $0x488] sm:$0xff]
        %v371 = vld [vmem:[%s187 + $0x490] sm:$0xff]
        %v372 = vld [vmem:[%s187 + $0x498] sm:$0xff]
        %v373 = vld [vmem:[%s187 + $0x4a0] sm:$0xff]
        %v374 = vld [vmem:[%s187 + $0x4a8] sm:$0xff]
        %v375 = vld [vmem:[%s187 + $0x4b0] sm:$0xff]
        %v376 = vld [vmem:[%s187 + $0x4b8] sm:$0xff]
        %v377 = vld [vmem:[%s187 + $0x4c0] sm:$0xff]
        %v378 = vld [vmem:[%s187 + $0x4c8] sm:$0xff]
        %v379 = vld [vmem:[%s187 + $0x4d0] sm:$0xff]
        %v380 = vld [vmem:[%s187 + $0x4d8] sm:$0xff]
        %v381 = vld [vmem:[%s187 + $0x4e0] sm:$0xff]
        %v382 = vld [vmem:[%s187 + $0x4e8] sm:$0xff]
        %v383 = vld [vmem:[%s187 + $0x4f0] sm:$0xff]
        %v384 = vld [vmem:[%s187 + $0x4f8] sm:$0xff]
        %v385 = vld [vmem:[%s187 + $0x500] sm:$0xff]
        %v386 = vld [vmem:[%s187 + $0x508] sm:$0xff]
        %v387 = vld [vmem:[%s187 + $0x510] sm:$0xff]
        %v388 = vld [vmem:[%s187 + $0x518] sm:$0xff]
        %v389 = vld [vmem:[%s187 + $0x520] sm:$0xff]
        %v390 = vld [vmem:[%s187 + $0x528] sm:$0xff]
        %v391 = vld [vmem:[%s187 + $0x530] sm:$0xff]
        %v392 = vld [vmem:[%s187 + $0x538] sm:$0xff]
        %v393 = vld [vmem:[%s187 + $0x540] sm:$0xff]
        %v394 = vld [vmem:[%s187 + $0x548] sm:$0xff]
        %v395 = vld [vmem:[%s187 + $0x550] sm:$0xff]
        %v396 = vld [vmem:[%s187 + $0x558] sm:$0xff]
        %v397 = vld [vmem:[%s187 + $0x560] sm:$0xff]
        %v398 = vld [vmem:[%s187 + $0x568] sm:$0xff]
        %v399 = vld [vmem:[%s187 + $0x570] sm:$0xff]
        %v400 = vld [vmem:[%s187 + $0x578] sm:$0xff]
        %v401 = vld [vmem:[%s187 + $0x580] sm:$0xff]
        %v402 = vld [vmem:[%s187 + $0x588] sm:$0xff]
        %v403 = vld [vmem:[%s187 + $0x590] sm:$0xff]
        %v404 = vld [vmem:[%s187 + $0x598] sm:$0xff]
        %v405 = vld [vmem:[%s187 + $0x5a0] sm:$0xff]
        %v406 = vld [vmem:[%s187 + $0x5a8] sm:$0xff]
        %v407 = vld [vmem:[%s187 + $0x5b0] sm:$0xff]
        %v408 = vld [vmem:[%s187 + $0x5b8] sm:$0xff]
        %v409 = vld [vmem:[%s187 + $0x5c0] sm:$0xff]
        %v410 = vld [vmem:[%s187 + $0x5c8] sm:$0xff]
        %v411 = vld [vmem:[%s187 + $0x5d0] sm:$0xff]
        %v412 = vld [vmem:[%s187 + $0x5d8] sm:$0xff]
        %v413 = vld [vmem:[%s187 + $0x5e0] sm:$0xff]
        %v414 = vld [vmem:[%s187 + $0x5e8] sm:$0xff]
        %v415 = vld [vmem:[%s187 + $0x5f0] sm:$0xff]
        %v416 = vld [vmem:[%s187 + $0x5f8] sm:$0xff]
        %v417 = vld [vmem:[%s187 + $0x600] sm:$0xff]
        %v418 = vld [vmem:[%s187 + $0x608] sm:$0xff]
        %v419 = vld [vmem:[%s187 + $0x610] sm:$0xff]
        %v420 = vld [vmem:[%s187 + $0x618] sm:$0xff]
        %v421 = vld [vmem:[%s187 + $0x620] sm:$0xff]
        %v422 = vld [vmem:[%s187 + $0x628] sm:$0xff]
        %v423 = vld [vmem:[%s187 + $0x630] sm:$0xff]
        %v424 = vld [vmem:[%s187 + $0x638] sm:$0xff]
        %v425 = vld [vmem:[%s187 + $0x640] sm:$0xff]
        %v426 = vld [vmem:[%s187 + $0x648] sm:$0xff]
        %v427 = vld [vmem:[%s187 + $0x650] sm:$0xff]
        %v428 = vld [vmem:[%s187 + $0x658] sm:$0xff]
        %v429 = vld [vmem:[%s187 + $0x660] sm:$0xff]
        %v430 = vld [vmem:[%s187 + $0x668] sm:$0xff]
        %v431 = vld [vmem:[%s187 + $0x670] sm:$0xff]
        %v432 = vld [vmem:[%s187 + $0x678] sm:$0xff]
        %v433 = vld [vmem:[%s187 + $0x680] sm:$0xff]
        %v434 = vld [vmem:[%s187 + $0x688] sm:$0xff]
        %v435 = vld [vmem:[%s187 + $0x690] sm:$0xff]
        %v436 = vld [vmem:[%s187 + $0x698] sm:$0xff]
        %v437 = vld [vmem:[%s187 + $0x6a0] sm:$0xff]
        %v438 = vld [vmem:[%s187 + $0x6a8] sm:$0xff]
        %v439 = vld [vmem:[%s187 + $0x6b0] sm:$0xff]
        %v440 = vld [vmem:[%s187 + $0x6b8] sm:$0xff]
        %v441 = vld [vmem:[%s187 + $0x6c0] sm:$0xff]
        %v442 = vld [vmem:[%s187 + $0x6c8] sm:$0xff]
        %v443 = vld [vmem:[%s187 + $0x6d0] sm:$0xff]
        %v444 = vld [vmem:[%s187 + $0x6d8] sm:$0xff]
        %v445 = vld [vmem:[%s187 + $0x6e0] sm:$0xff]
        %v446 = vld [vmem:[%s187 + $0x6e8] sm:$0xff]
        %v447 = vld [vmem:[%s187 + $0x6f0] sm:$0xff]
        %v448 = vld [vmem:[%s187 + $0x6f8] sm:$0xff]
        %449 = vmatprep.subr.mxu0 %v226
        %450 = vmatpush1.xpose.msra.mxu0 %v225
        %451 = vmatprep.subr.mxu0 %v228
        %452 = vmatpush1.xpose.msra.mxu0 %v227
        %453 = vmatprep.subr.mxu0 %v230
        %454 = vmatpush1.xpose.msra.mxu0 %v229
        %455 = vmatprep.subr.mxu0 %v232
        %456 = vmatpush1.xpose.msra.mxu0 %v231
        %457 = vmatprep.subr.mxu0 %v234
        %458 = vmatpush1.xpose.msra.mxu0 %v233
        %459 = vmatprep.subr.mxu0 %v236
        %460 = vmatpush1.xpose.msra.mxu0 %v235
        %461 = vmatprep.subr.mxu0 %v238
        %462 = vmatpush1.xpose.msra.mxu0 %v237
        %463 = vmatprep.subr.mxu0 %v240
        %464 = vmatpush1.xpose.msra.mxu0 %v239
        %465 = vmatprep.subr.mxu0 %v242
        %466 = vmatpush1.xpose.msra.mxu0 %v241
        %467 = vmatprep.subr.mxu0 %v244
        %468 = vmatpush1.xpose.msra.mxu0 %v243
        %469 = vmatprep.subr.mxu0 %v246
        %470 = vmatpush1.xpose.msra.mxu0 %v245
        %471 = vmatprep.subr.mxu0 %v248
        %472 = vmatpush1.xpose.msra.mxu0 %v247
        %473 = vmatprep.subr.mxu0 %v250
        %474 = vmatpush1.xpose.msra.mxu0 %v249
        %475 = vmatprep.subr.mxu0 %v252
        %476 = vmatpush1.xpose.msra.mxu0 %v251
        %477 = vmatprep.subr.mxu0 %v254
        %478 = vmatpush1.xpose.msra.mxu0 %v253
        %479 = vmatprep.subr.mxu0 %v256
        %480 = vmatpush1.xpose.msra.mxu0 %v255
        %481 = vmatprep.subr.mxu0 %v258
        %482 = vmatpush1.xpose.msra.mxu0 %v257
        %483 = vmatprep.subr.mxu0 %v260
        %484 = vmatpush1.xpose.msra.mxu0 %v259
        %485 = vmatprep.subr.mxu0 %v262
        %486 = vmatpush1.xpose.msra.mxu0 %v261
        %487 = vmatprep.subr.mxu0 %v264
        %488 = vmatpush1.xpose.msra.mxu0 %v263
        %489 = vmatprep.subr.mxu0 %v266
        %490 = vmatpush1.xpose.msra.mxu0 %v265
        %491 = vmatprep.subr.mxu0 %v268
        %492 = vmatpush1.xpose.msra.mxu0 %v267
        %493 = vmatprep.subr.mxu0 %v270
        %494 = vmatpush1.xpose.msra.mxu0 %v269
        %495 = vmatprep.subr.mxu0 %v272
        %496 = vmatpush1.xpose.msra.mxu0 %v271
        %497 = vmatprep.subr.mxu0 %v274
        %498 = vmatpush1.xpose.msra.mxu0 %v273
        %499 = vmatprep.subr.mxu0 %v276
        %500 = vmatpush1.xpose.msra.mxu0 %v275
        %501 = vmatprep.subr.mxu0 %v278
        %502 = vmatpush1.xpose.msra.mxu0 %v277
        %503 = vmatprep.subr.mxu0 %v280
        %504 = vmatpush1.xpose.msra.mxu0 %v279
        %505 = vmatprep.subr.mxu0 %v282
        %506 = vmatpush1.xpose.msra.mxu0 %v281
        %507 = vmatprep.subr.mxu0 %v284
        %508 = vmatpush1.xpose.msra.mxu0 %v283
        %509 = vmatprep.subr.mxu0 %v286
        %510 = vmatpush1.xpose.msra.mxu0 %v285
        %511 = vmatprep.subr.mxu0 %v288
        %512 = vmatpush1.xpose.msra.mxu0 %v287
        %513 = vmatprep.mubr.f32.mxu0 %v222
        %514 = vmatmul.mubr.f32.gmra.mrb[0].mxu0 %v221
        %v515 = vpop.f32.mrb[0].mxu0
        %v516 = vadd.f32 0.0, %v515
        %v517 = vpop.f32.mrb[0].mxu0
        %v518 = vadd.f32 0.0, %v517
        %519 = vmatprep.mubr.f32.mxu0 %v224
        %520 = vmatmul.mubr.f32.gmra.mrb[0].mxu0 %v223
        %v521 = vpop.f32.mrb[0].mxu0
        %v522 = vadd.f32 0.0, %v521
        %v523 = vpop.f32.mrb[0].mxu0
        %v524 = vadd.f32 0.0, %v523
        %525 = vdwg.mxu0
        %526 = vmatprep.subr.mxu0 %v290
        %527 = vmatpush1.xpose.msra.mxu0 %v289
        %528 = vmatprep.subr.mxu0 %v292
        %529 = vmatpush1.xpose.msra.mxu0 %v291
        %530 = vmatprep.subr.mxu0 %v294
        %531 = vmatpush1.xpose.msra.mxu0 %v293
        %532 = vmatprep.subr.mxu0 %v296
        %533 = vmatpush1.xpose.msra.mxu0 %v295
        %534 = vmatprep.subr.mxu0 %v298
        %535 = vmatpush1.xpose.msra.mxu0 %v297
        %536 = vmatprep.subr.mxu0 %v300
        %537 = vmatpush1.xpose.msra.mxu0 %v299
        %538 = vmatprep.subr.mxu0 %v302
        %539 = vmatpush1.xpose.msra.mxu0 %v301
        %540 = vmatprep.subr.mxu0 %v304
        %541 = vmatpush1.xpose.msra.mxu0 %v303
        %542 = vmatprep.subr.mxu0 %v306
        %543 = vmatpush1.xpose.msra.mxu0 %v305
        %544 = vmatprep.subr.mxu0 %v308
        %545 = vmatpush1.xpose.msra.mxu0 %v307
        %546 = vmatprep.subr.mxu0 %v310
        %547 = vmatpush1.xpose.msra.mxu0 %v309
        %548 = vmatprep.subr.mxu0 %v312
        %549 = vmatpush1.xpose.msra.mxu0 %v311
        %550 = vmatprep.subr.mxu0 %v314
        %551 = vmatpush1.xpose.msra.mxu0 %v313
        %552 = vmatprep.subr.mxu0 %v316
        %553 = vmatpush1.xpose.msra.mxu0 %v315
        %554 = vmatprep.subr.mxu0 %v318
        %555 = vmatpush1.xpose.msra.mxu0 %v317
        %556 = vmatprep.subr.mxu0 %v320
        %557 = vmatpush1.xpose.msra.mxu0 %v319
        %558 = vmatprep.subr.mxu0 %v322
        %559 = vmatpush1.xpose.msra.mxu0 %v321
        %560 = vmatprep.subr.mxu0 %v324
        %561 = vmatpush1.xpose.msra.mxu0 %v323
        %562 = vmatprep.subr.mxu0 %v326
        %563 = vmatpush1.xpose.msra.mxu0 %v325
        %564 = vmatprep.subr.mxu0 %v328
        %565 = vmatpush1.xpose.msra.mxu0 %v327
        %566 = vmatprep.subr.mxu0 %v330
        %567 = vmatpush1.xpose.msra.mxu0 %v329
        %568 = vmatprep.subr.mxu0 %v332
        %569 = vmatpush1.xpose.msra.mxu0 %v331
        %570 = vmatprep.subr.mxu0 %v334
        %571 = vmatpush1.xpose.msra.mxu0 %v333
        %572 = vmatprep.subr.mxu0 %v336
        %573 = vmatpush1.xpose.msra.mxu0 %v335
        %574 = vmatprep.subr.mxu0 %v338
        %575 = vmatpush1.xpose.msra.mxu0 %v337
        %576 = vmatprep.subr.mxu0 %v340
        %577 = vmatpush1.xpose.msra.mxu0 %v339
        %578 = vmatprep.subr.mxu0 %v342
        %579 = vmatpush1.xpose.msra.mxu0 %v341
        %580 = vmatprep.subr.mxu0 %v344
        %581 = vmatpush1.xpose.msra.mxu0 %v343
        %582 = vmatprep.subr.mxu0 %v346
        %583 = vmatpush1.xpose.msra.mxu0 %v345
        %584 = vmatprep.subr.mxu0 %v348
        %585 = vmatpush1.xpose.msra.mxu0 %v347
        %586 = vmatprep.subr.mxu0 %v350
        %587 = vmatpush1.xpose.msra.mxu0 %v349
        %588 = vmatprep.subr.mxu0 %v352
        %589 = vmatpush1.xpose.msra.mxu0 %v351
        %590 = vmatprep.mubr.f32.mxu0 %v222
        %591 = vmatmul.mubr.f32.gmra.mrb[0].mxu0 %v221
        %v592 = vpop.f32.mrb[0].mxu0
        %v593 = vadd.f32 0.0, %v592
        %v594 = vpop.f32.mrb[0].mxu0
        %v595 = vadd.f32 0.0, %v594
        %596 = vmatprep.mubr.f32.mxu0 %v224
        %597 = vmatmul.mubr.f32.gmra.mrb[0].mxu0 %v223
        %v598 = vpop.f32.mrb[0].mxu0
        %v599 = vadd.f32 0.0, %v598
        %v600 = vpop.f32.mrb[0].mxu0
        %v601 = vadd.f32 0.0, %v600
        %602 = vdwg.mxu0
        %603 = vmatprep.subr.mxu0 %v354
        %604 = vmatpush1.xpose.msra.mxu0 %v353
        %605 = vmatprep.subr.mxu0 %v356
        %606 = vmatpush1.xpose.msra.mxu0 %v355
        %607 = vmatprep.subr.mxu0 %v358
        %608 = vmatpush1.xpose.msra.mxu0 %v357
        %609 = vmatprep.subr.mxu0 %v360
        %610 = vmatpush1.xpose.msra.mxu0 %v359
        %611 = vmatprep.subr.mxu0 %v362
        %612 = vmatpush1.xpose.msra.mxu0 %v361
        %613 = vmatprep.subr.mxu0 %v364
        %614 = vmatpush1.xpose.msra.mxu0 %v363
        %615 = vmatprep.subr.mxu0 %v366
        %616 = vmatpush1.xpose.msra.mxu0 %v365
        %617 = vmatprep.subr.mxu0 %v368
        %618 = vmatpush1.xpose.msra.mxu0 %v367
        %619 = vmatprep.subr.mxu0 %v370
        %620 = vmatpush1.xpose.msra.mxu0 %v369
        %621 = vmatprep.subr.mxu0 %v372
        %622 = vmatpush1.xpose.msra.mxu0 %v371
        %623 = vmatprep.subr.mxu0 %v374
        %624 = vmatpush1.xpose.msra.mxu0 %v373
        %625 = vmatprep.subr.mxu0 %v376
        %626 = vmatpush1.xpose.msra.mxu0 %v375
        %627 = vmatprep.subr.mxu0 %v378
        %628 = vmatpush1.xpose.msra.mxu0 %v377
        %629 = vmatprep.subr.mxu0 %v380
        %630 = vmatpush1.xpose.msra.mxu0 %v379
        %631 = vmatprep.subr.mxu0 %v382
        %632 = vmatpush1.xpose.msra.mxu0 %v381
        %633 = vmatprep.subr.mxu0 %v384
        %634 = vmatpush1.xpose.msra.mxu0 %v383
        %635 = vmatprep.subr.mxu0 %v386
        %636 = vmatpush1.xpose.msra.mxu0 %v385
        %637 = vmatprep.subr.mxu0 %v388
        %638 = vmatpush1.xpose.msra.mxu0 %v387
        %639 = vmatprep.subr.mxu0 %v390
        %640 = vmatpush1.xpose.msra.mxu0 %v389
        %641 = vmatprep.subr.mxu0 %v392
        %642 = vmatpush1.xpose.msra.mxu0 %v391
        %643 = vmatprep.subr.mxu0 %v394
        %644 = vmatpush1.xpose.msra.mxu0 %v393
        %645 = vmatprep.subr.mxu0 %v396
        %646 = vmatpush1.xpose.msra.mxu0 %v395
        %647 = vmatprep.subr.mxu0 %v398
        %648 = vmatpush1.xpose.msra.mxu0 %v397
        %649 = vmatprep.subr.mxu0 %v400
        %650 = vmatpush1.xpose.msra.mxu0 %v399
        %651 = vmatprep.subr.mxu0 %v402
        %652 = vmatpush1.xpose.msra.mxu0 %v401
        %653 = vmatprep.subr.mxu0 %v404
        %654 = vmatpush1.xpose.msra.mxu0 %v403
        %655 = vmatprep.subr.mxu0 %v406
        %656 = vmatpush1.xpose.msra.mxu0 %v405
        %657 = vmatprep.subr.mxu0 %v408
        %658 = vmatpush1.xpose.msra.mxu0 %v407
        %659 = vmatprep.subr.mxu0 %v410
        %660 = vmatpush1.xpose.msra.mxu0 %v409
        %661 = vmatprep.subr.mxu0 %v412
        %662 = vmatpush1.xpose.msra.mxu0 %v411
        %663 = vmatprep.subr.mxu0 %v414
        %664 = vmatpush1.xpose.msra.mxu0 %v413
        %665 = vmatprep.subr.mxu0 %v416
        %666 = vmatpush1.xpose.msra.mxu0 %v415
        %667 = vmatprep.mubr.f32.mxu0 %v222
        %668 = vmatmul.mubr.f32.gmra.mrb[0].mxu0 %v221
        %v669 = vpop.f32.mrb[0].mxu0
        %v670 = vadd.f32 0.0, %v669
        %v671 = vpop.f32.mrb[0].mxu0
        %v672 = vadd.f32 0.0, %v671
        %673 = vmatprep.mubr.f32.mxu0 %v224
        %674 = vmatmul.mubr.f32.gmra.mrb[0].mxu0 %v223
        %v675 = vpop.f32.mrb[0].mxu0
        %v676 = vadd.f32 0.0, %v675
        %v677 = vpop.f32.mrb[0].mxu0
        %v678 = vadd.f32 0.0, %v677
        %679 = vdwg.mxu0
        %680 = vmatprep.subr.mxu0 %v418
        %681 = vmatpush1.xpose.msra.mxu0 %v417
        %682 = vmatprep.subr.mxu0 %v420
        %683 = vmatpush1.xpose.msra.mxu0 %v419
        %684 = vmatprep.subr.mxu0 %v422
        %685 = vmatpush1.xpose.msra.mxu0 %v421
        %686 = vmatprep.subr.mxu0 %v424
        %687 = vmatpush1.xpose.msra.mxu0 %v423
        %688 = vmatprep.subr.mxu0 %v426
        %689 = vmatpush1.xpose.msra.mxu0 %v425
        %690 = vmatprep.subr.mxu0 %v428
        %691 = vmatpush1.xpose.msra.mxu0 %v427
        %692 = vmatprep.subr.mxu0 %v430
        %693 = vmatpush1.xpose.msra.mxu0 %v429
        %694 = vmatprep.subr.mxu0 %v432
        %695 = vmatpush1.xpose.msra.mxu0 %v431
        %696 = vmatprep.subr.mxu0 %v434
        %697 = vmatpush1.xpose.msra.mxu0 %v433
        %698 = vmatprep.subr.mxu0 %v436
        %699 = vmatpush1.xpose.msra.mxu0 %v435
        %700 = vmatprep.subr.mxu0 %v438
        %701 = vmatpush1.xpose.msra.mxu0 %v437
        %702 = vmatprep.subr.mxu0 %v440
        %703 = vmatpush1.xpose.msra.mxu0 %v439
        %704 = vmatprep.subr.mxu0 %v442
        %705 = vmatpush1.xpose.msra.mxu0 %v441
        %706 = vmatprep.subr.mxu0 %v444
        %707 = vmatpush1.xpose.msra.mxu0 %v443
        %708 = vmatprep.subr.mxu0 %v446
        %709 = vmatpush1.xpose.msra.mxu0 %v445
        %710 = vmatprep.subr.mxu0 %v448
        %711 = vmatpush1.xpose.msra.mxu0 %v447
        %712 = vmatprep.subr.mxu0 0.0
        %713 = vmatpush1.xpose.msra.mxu0 0.0
        %714 = vmatprep.subr.mxu0 0.0
        %715 = vmatpush1.xpose.msra.mxu0 0.0
        %716 = vmatprep.subr.mxu0 0.0
        %717 = vmatpush1.xpose.msra.mxu0 0.0
        %718 = vmatprep.subr.mxu0 0.0
        %719 = vmatpush1.xpose.msra.mxu0 0.0
        %720 = vmatprep.subr.mxu0 0.0
        %721 = vmatpush1.xpose.msra.mxu0 0.0
        %722 = vmatprep.subr.mxu0 0.0
        %723 = vmatpush1.xpose.msra.mxu0 0.0
        %724 = vmatprep.subr.mxu0 0.0
        %725 = vmatpush1.xpose.msra.mxu0 0.0
        %726 = vmatprep.subr.mxu0 0.0
        %727 = vmatpush1.xpose.msra.mxu0 0.0
        %728 = vmatprep.subr.mxu0 0.0
        %729 = vmatpush1.xpose.msra.mxu0 0.0
        %730 = vmatprep.subr.mxu0 0.0
        %731 = vmatpush1.xpose.msra.mxu0 0.0
        %732 = vmatprep.subr.mxu0 0.0
        %733 = vmatpush1.xpose.msra.mxu0 0.0
        %734 = vmatprep.subr.mxu0 0.0
        %735 = vmatpush1.xpose.msra.mxu0 0.0
        %736 = vmatprep.subr.mxu0 0.0
        %737 = vmatpush1.xpose.msra.mxu0 0.0
        %738 = vmatprep.subr.mxu0 0.0
        %739 = vmatpush1.xpose.msra.mxu0 0.0
        %740 = vmatprep.subr.mxu0 0.0
        %741 = vmatpush1.xpose.msra.mxu0 0.0
        %742 = vmatprep.subr.mxu0 0.0
        %743 = vmatpush1.xpose.msra.mxu0 0.0
        %744 = vmatprep.mubr.f32.mxu0 %v222
        %745 = vmatmul.mubr.f32.gmra.mrb[0].mxu0 %v221
        %v746 = vpop.f32.mrb[0].mxu0
        %v747 = vadd.f32 0.0, %v746
        %v748 = vpop.f32.mrb[0].mxu0
        %749 = vmatprep.mubr.f32.mxu0 %v224
        %750 = vmatmul.mubr.f32.gmra.mrb[0].mxu0 %v223
        %v751 = vpop.f32.mrb[0].mxu0
        %v752 = vadd.f32 0.0, %v751
        %v753 = vpop.f32.mrb[0].mxu0
        %754 = vdwg.mxu0
        %v755 = vmul.f32 %v516, 0.5
        %v756 = vmul.f32 %v518, 0.5
        %v757 = vmul.f32 %v593, 0.5
        %v758 = vmul.f32 %v595, 0.5
        %v759 = vmul.f32 %v670, 0.5
        %v760 = vmul.f32 %v672, 0.5
        %v761 = vmul.f32 %v747, 0.5
        %v762 = vmul.f32 %v522, 0.5
        %v763 = vmul.f32 %v524, 0.5
        %v764 = vmul.f32 %v599, 0.5
        %v765 = vmul.f32 %v601, 0.5
        %v766 = vmul.f32 %v676, 0.5
        %v767 = vmul.f32 %v678, 0.5
        %v768 = vmul.f32 %v752, 0.5
        %769 = vst [vmem:[%s207] sm:$0xff] %v755
        %770 = vst [vmem:[%s207 + $0x8] sm:$0xff] %v756
        %771 = vst [vmem:[%s207 + $0x10] sm:$0xff] %v757
        %772 = vst [vmem:[%s207 + $0x18] sm:$0xff] %v758
        %773 = vst [vmem:[%s207 + $0x20] sm:$0xff] %v759
        %774 = vst [vmem:[%s207 + $0x28] sm:$0xff] %v760
        %775 = vst [vmem:[%s207 + $0x30] sm:$0xff] %v761
        %776 = vst [vmem:[%s207 + $0x38] sm:$0xff] %v762
        %777 = vst [vmem:[%s207 + $0x40] sm:$0xff] %v763
        %778 = vst [vmem:[%s207 + $0x48] sm:$0xff] %v764
        %779 = vst [vmem:[%s207 + $0x50] sm:$0xff] %v765
        %780 = vst [vmem:[%s207 + $0x58] sm:$0xff] %v766
        %781 = vst [vmem:[%s207 + $0x60] sm:$0xff] %v767
        %782 = vst [vmem:[%s207 + $0x68] sm:$0xff] %v768
        %s783 = sand.u32 %s94, 1
        %s784 = scalar_lea.sflag [#allocation4], %s783
        %s785 = sand.u32 %s94, 1
        %s786 = smul.addr %s785, 112
        %s787 = scalar_lea.vmem [#allocation7], %s786
        // Predicated region
        $region37: #{tpu_custom_call.1} parent=27 // pred_check
          %p788 = pneg %p104
        $region38: #{tpu_custom_call.1} parent=27 // pred_check_branch
          %790 = sbr.rel (%p788) target = $region40
        $region39: #{tpu_custom_call.1} parent=27 // pred_region
          %s791 = smul.u32 2, %s24
          %s792 = smul.u32 7, %s25
          %s793 = ssub.s32 8, %s792
          %p794 = scmp.lt.s32.totalorder %s793, 7
          %s795 = scalar_select %p794, %s793, 7
          %s796 = smul.u32 256, %s795
          %s798 = ssub.s32 1792, %s796
          %799 = vsyncadd %s784, %s798
          %p800 = scmp.ne.s32.totalorder 0, %s796
          %s801 = smul.addr %s791, 8
          %s802 = sadd.s32 %s792, %s801
          %s803 = smul.addr %s802, 128
          %s804 = scalar_lea.hbm %s2, %s803
          %s805 = smul.u32 %s795, 8
          %s806 = smul.u32 %s805, 2
          %s807 = sshll.u32 %s787, 4
          %s808 = int_to_ptr.vmem [resolvable:$true] %s807
          %s809 = sshll.u32 %s806, 4
          %813 = dma.vmem_to_hbm [thread:$0]  (%p800), %s808, %s809, %s804, %s784, 896, 1024, %s805
        $region40: #{tpu_custom_call.1} parent=27 // pred_fallthru
          _
      $region28: #{tpu_custom_call.1} parent=5 // pred_fallthru
        _
      %p814 = scmp.le.s32.totalorder 2, %s15
      // Predicated region
      $region41: #{tpu_custom_call.1} parent=5 // pred_check
        %p815 = pneg %p814
      $region42: #{tpu_custom_call.1} parent=5 // pred_check_branch
        %817 = sbr.rel (%p815) target = $region44
      $region43: #{tpu_custom_call.1} parent=5 // pred_region
        %s818 = ssub.s32 %s15, 2
        // Predicated region
        $region45: #{tpu_custom_call.1} parent=43 // pred_check
          %p819 = pneg %p110
        $region46: #{tpu_custom_call.1} parent=43 // pred_check_branch
          %821 = sbr.rel (%p819) target = $region48
        $region47: #{tpu_custom_call.1} parent=43 // pred_region
          %s822 = sand.u32 %s95, 1
          %s823 = scalar_lea.sflag [#allocation4], %s822
          %s824 = sand.u32 %s95, 1
          %s825 = smul.addr %s824, 112
          %s826 = scalar_lea.vmem [#allocation7], %s825
          %827 = dma.done %s823, 1792
        $region48: #{tpu_custom_call.1} parent=43 // pred_fallthru
          _
      $region44: #{tpu_custom_call.1} parent=5 // pred_fallthru
        _
    $region6: #{tpu_custom_call.1} parent=1 // loop_footer
      %s19 = sadd.s32 1, %s15
    $region7: #{tpu_custom_call.1} parent=1 // loop_footer_branch
      %14 = sbr.rel target = $region3
    $region8: #{tpu_custom_call.1} parent=1 // loop_exit
      _
    %828 = vsyncpa [#allocation3], 1
    %s829 = scalar_lea.sflag [#allocation3], 1
    %830 = vsyncpa %s829, 1
    %831 = vsyncpa [#allocation6], 1
    %s832 = scalar_lea.sflag [#allocation6], 1
    %833 = vsyncpa %s832, 1
    %834 = vsyncpa [#allocation4], 1
    %s835 = scalar_lea.sflag [#allocation4], 1
    %836 = vsyncpa %s835, 1

</llo_original>
